<compile_context>
chip_gen: v5e
topology: v5e:2x2
jax: 0.10.0
libtpu: 0.0.40
codegen_flags: <defaults>
</compile_context>

<pallas_src>
import jax
import jax.numpy as jnp
from jax.experimental import pallas as pl
from jax.experimental.pallas import tpu as pltpu

LANE = 128     # lane width of a vreg
SUBLANE = 8    # sublane count of a vreg (f32)


def _round_up(x, m):
    return ((x + m - 1) // m) * m


def _cdiv(a, b):
    return (a + b - 1) // b


def qnet_kernel(x_ref, w1_ref, b1_ref, w2_ref, b2_ref, w3_ref, b3_ref, out_ref):
    # Matmul operand dtype follows the (pre-cast) weights: bf16 -> MXU fast path.
    # All accumulation is f32 (preferred_element_type); bias add / ReLU in f32.
    cdt = w1_ref.dtype

    x = x_ref[...].astype(cdt)
    # hidden = relu(x @ W1 + b1)
    h = jnp.dot(x, w1_ref[...], preferred_element_type=jnp.float32) + b1_ref[...]
    h = jnp.maximum(h, 0.0)
    # hidden2 = relu(h @ W2 + b2)
    h = jnp.dot(h.astype(cdt), w2_ref[...], preferred_element_type=jnp.float32) + b2_ref[...]
    h = jnp.maximum(h, 0.0)
    # output = h @ W3 + b3  (no activation)
    out = jnp.dot(h.astype(cdt), w3_ref[...], preferred_element_type=jnp.float32) + b3_ref[...]
    out_ref[...] = out.astype(out_ref.dtype)


def qnetwork_forward(state, params, *, tile_b=2048):
    """Fused MLP forward (one Pallas kernel, batch-tiled 1-D grid).

    state:  (B, state_size) float32
    params: dict with w1 (S,128), b1 (1,128), w2 (128,128), b2 (1,128),
            w3 (128,A), b3 (1,A); weights may be bf16 (see prepare_params).
    returns (B, A) float32
    """
    B, S = state.shape
    H = params["w1"].shape[1]
    A = params["w3"].shape[1]
    assert params["w1"].shape[0] == S and params["w3"].shape[0] == H

    # Batch tile: multiple of the sublane count, capped at tile_b.  Prefer >=2
    # roughly even grid steps when the batch allows it so the "parallel" batch
    # axis can split across both TensorCores on v7x (no effect on v5e/v6e).
    num_tiles = max(_cdiv(B, tile_b), 2 if B > SUBLANE else 1)
    tb = min(_round_up(_cdiv(B, num_tiles), SUBLANE), _round_up(tile_b, SUBLANE))
    grid = (_cdiv(B, tb),)   # ragged last block: OOB rows are don't-care

    def batch_spec(shape):
        return pl.BlockSpec(shape, lambda i: (i, 0))

    def resident_spec(shape):
        # Constant block index -> Pallas skips re-DMA; weights stay in VMEM.
        return pl.BlockSpec(shape, lambda i: (0, 0))

    nbytes = lambda a: a.size * a.dtype.itemsize
    bytes_accessed = (
        nbytes(state)
        + sum(nbytes(params[k]) for k in ("w1", "b1", "w2", "b2", "w3", "b3"))
        + B * A * 4
    )
    flops = 2 * B * (S * H + H * H + H * A)

    return pl.pallas_call(
        qnet_kernel,
        out_shape=jax.ShapeDtypeStruct((B, A), jnp.float32),
        grid_spec=pltpu.PrefetchScalarGridSpec(
            num_scalar_prefetch=0,
            grid=grid,
            in_specs=[
                batch_spec((tb, S)),        # state tile (full, unpadded feature dim)
                resident_spec((S, H)),      # w1
                resident_spec((1, H)),      # b1
                resident_spec((H, H)),      # w2
                resident_spec((1, H)),      # b2
                resident_spec((H, A)),      # w3 (full, unpadded action dim)
                resident_spec((1, A)),      # b3
            ],
            out_specs=batch_spec((tb, A)),  # unpadded output writeback
        ),
        compiler_params=pltpu.CompilerParams(
            dimension_semantics=("parallel",),   # batch tiles across TCs on v7x
        ),
        cost_estimate=pl.CostEstimate(
            flops=flops, transcendentals=0, bytes_accessed=bytes_accessed
        ),
    )(state, params["w1"], params["b1"], params["w2"], params["b2"],
      params["w3"], params["b3"])


def init_params(key, state_size, action_size, hidden=128):
    """Deterministic init mimicking nn.Linear default U(-1/sqrt(fan_in), +1/sqrt(fan_in)).

    Weights are stored (in_features, out_features); biases as (1, out_features), f32.
    """
    ks = jax.random.split(key, 6)

    def linear(kw, kb, fan_in, fan_out):
        bound = 1.0 / jnp.sqrt(float(fan_in))
        w = jax.random.uniform(kw, (fan_in, fan_out), jnp.float32, -bound, bound)
        b = jax.random.uniform(kb, (1, fan_out), jnp.float32, -bound, bound)
        return w, b

    w1, b1 = linear(ks[0], ks[1], state_size, hidden)
    w2, b2 = linear(ks[2], ks[3], hidden, hidden)
    w3, b3 = linear(ks[4], ks[5], hidden, action_size)
    return {"w1": w1, "b1": b1, "w2": w2, "b2": b2, "w3": w3, "b3": b3}


def prepare_params(params, matmul_dtype=jnp.bfloat16):
    """One-time conversion to the kernel's preferred layout: matmul operands
    (weights) in `matmul_dtype` (bf16 -> MXU fast path, f32 accumulate in-kernel),
    biases kept f32.  Do this once, outside the per-step forward call."""
    out = dict(params)
    for k in ("w1", "w2", "w3"):
        out[k] = params[k].astype(matmul_dtype)
    for k in ("b1", "b2", "b3"):
        out[k] = params[k].astype(jnp.float32)
    return out


def qnetwork_ref(state, p):
    h = jax.nn.relu(state @ p["w1"] + p["b1"])
    h = jax.nn.relu(h @ p["w2"] + p["b2"])
    return h @ p["w3"] + p["b3"]


if __name__ == "__main__":
    key = jax.random.PRNGKey(0)
    k_param, k_state, k_state2 = jax.random.split(key, 3)

    batch = 8
    state_size = 8
    action_size = 4

    params_f32 = init_params(k_param, state_size, action_size)

    # 1) Exact check: f32 matmul operands (single grid step).
    state = jax.random.normal(k_state, (batch, state_size), jnp.float32)
    out = qnetwork_forward(state, prepare_params(params_f32, jnp.float32))
    out = jax.block_until_ready(out)
    ref = qnetwork_ref(state, params_f32)
    assert out.shape == (batch, action_size)
    assert jnp.allclose(out, ref, atol=1e-5, rtol=1e-5), "f32 path mismatch"

    # 2) Default bf16-operand path, batch not divisible by the tile
    #    (exercises multi-step grid + ragged last block).
    params_bf16 = prepare_params(params_f32)  # bf16 weights, f32 biases
    big_batch = 52
    state2 = jax.random.normal(k_state2, (big_batch, state_size), jnp.float32)
    out2 = qnetwork_forward(state2, params_bf16)
    out2 = jax.block_until_ready(out2)
    ref2 = qnetwork_ref(state2, params_f32)
    assert out2.shape == (big_batch, action_size)
    assert jnp.allclose(out2, ref2, atol=5e-2, rtol=5e-2), "bf16 path mismatch"

    print("KERNEL_OK")
</pallas_src>

<mosaic_0001>
module attributes {stable_mosaic.version = 11 : i64} {
  func.func @qnet_kernel(%arg0: i32, %arg1: memref<8x8xf32, #tpu.memory_space<vmem>>, %arg2: memref<8x128xf32, #tpu.memory_space<vmem>>, %arg3: memref<1x128xf32, #tpu.memory_space<vmem>>, %arg4: memref<128x128xf32, #tpu.memory_space<vmem>>, %arg5: memref<1x128xf32, #tpu.memory_space<vmem>>, %arg6: memref<128x4xf32, #tpu.memory_space<vmem>>, %arg7: memref<1x4xf32, #tpu.memory_space<vmem>>, %arg8: memref<8x4xf32, #tpu.memory_space<vmem>>) attributes {dimension_semantics = [#tpu.dimension_semantics<parallel>], iteration_bounds = array<i64: 1>, scalar_prefetch = 0 : i64, scratch_operands = 0 : i64, tpu.core_type = #tpu.core_type<tc>, window_params = [{transform_indices = @transform_0, window_bounds = array<i64: 8, 8>}, {pipeline_mode = #tpu.pipeline_mode<synchronous>, transform_indices = @transform_1, window_bounds = array<i64: 8, 128>}, {pipeline_mode = #tpu.pipeline_mode<synchronous>, transform_indices = @transform_2, window_bounds = array<i64: 1, 128>}, {pipeline_mode = #tpu.pipeline_mode<synchronous>, transform_indices = @transform_3, window_bounds = array<i64: 128, 128>}, {pipeline_mode = #tpu.pipeline_mode<synchronous>, transform_indices = @transform_4, window_bounds = array<i64: 1, 128>}, {pipeline_mode = #tpu.pipeline_mode<synchronous>, transform_indices = @transform_5, window_bounds = array<i64: 128, 4>}, {pipeline_mode = #tpu.pipeline_mode<synchronous>, transform_indices = @transform_6, window_bounds = array<i64: 1, 4>}, {transform_indices = @transform_7, window_bounds = array<i64: 8, 4>}]} {
    %c0 = arith.constant 0 : index
    %c0_0 = arith.constant 0 : index
    %0 = vector.load %arg1[%c0, %c0_0] : memref<8x8xf32, #tpu.memory_space<vmem>>, vector<8x8xf32>
    %c0_1 = arith.constant 0 : index
    %c0_2 = arith.constant 0 : index
    %1 = vector.load %arg2[%c0_1, %c0_2] : memref<8x128xf32, #tpu.memory_space<vmem>>, vector<8x128xf32>
    %cst = arith.constant dense<0.000000e+00> : vector<8x128xf32>
    %2 = tpu.matmul %0, %1, %cst {dimension_numbers = #tpu.dot_dimension_numbers<[1], [0], [0], [1], [0, 0, 1, 1], [], []>} : vector<8x8xf32>, vector<8x128xf32>, vector<8x128xf32> -> vector<8x128xf32>
    %c0_3 = arith.constant 0 : index
    %c0_4 = arith.constant 0 : index
    %3 = vector.load %arg3[%c0_3, %c0_4] : memref<1x128xf32, #tpu.memory_space<vmem>>, vector<1x128xf32>
    %4 = vector.broadcast %3 : vector<1x128xf32> to vector<8x128xf32>
    %5 = arith.addf %2, %4 : vector<8x128xf32>
    %cst_5 = arith.constant 0.000000e+00 : f32
    %6 = vector.broadcast %cst_5 : f32 to vector<8x128xf32>
    %7 = arith.maximumf %5, %6 : vector<8x128xf32>
    %c0_6 = arith.constant 0 : index
    %c0_7 = arith.constant 0 : index
    %8 = vector.load %arg4[%c0_6, %c0_7] : memref<128x128xf32, #tpu.memory_space<vmem>>, vector<128x128xf32>
    %cst_8 = arith.constant dense<0.000000e+00> : vector<8x128xf32>
    %9 = tpu.matmul %7, %8, %cst_8 {dimension_numbers = #tpu.dot_dimension_numbers<[1], [0], [0], [1], [0, 0, 1, 1], [], []>} : vector<8x128xf32>, vector<128x128xf32>, vector<8x128xf32> -> vector<8x128xf32>
    %c0_9 = arith.constant 0 : index
    %c0_10 = arith.constant 0 : index
    %10 = vector.load %arg5[%c0_9, %c0_10] : memref<1x128xf32, #tpu.memory_space<vmem>>, vector<1x128xf32>
    %11 = vector.broadcast %10 : vector<1x128xf32> to vector<8x128xf32>
    %12 = arith.addf %9, %11 : vector<8x128xf32>
    %cst_11 = arith.constant 0.000000e+00 : f32
    %13 = vector.broadcast %cst_11 : f32 to vector<8x128xf32>
    %14 = arith.maximumf %12, %13 : vector<8x128xf32>
    %c0_12 = arith.constant 0 : index
    %c0_13 = arith.constant 0 : index
    %15 = vector.load %arg6[%c0_12, %c0_13] : memref<128x4xf32, #tpu.memory_space<vmem>>, vector<128x4xf32>
    %cst_14 = arith.constant dense<0.000000e+00> : vector<8x4xf32>
    %16 = tpu.matmul %14, %15, %cst_14 {dimension_numbers = #tpu.dot_dimension_numbers<[1], [0], [0], [1], [0, 0, 1, 1], [], []>} : vector<8x128xf32>, vector<128x4xf32>, vector<8x4xf32> -> vector<8x4xf32>
    %c0_15 = arith.constant 0 : index
    %c0_16 = arith.constant 0 : index
    %17 = vector.load %arg7[%c0_15, %c0_16] : memref<1x4xf32, #tpu.memory_space<vmem>>, vector<1x4xf32>
    %18 = vector.broadcast %17 : vector<1x4xf32> to vector<8x4xf32>
    %19 = arith.addf %16, %18 : vector<8x4xf32>
    %c0_17 = arith.constant 0 : index
    %c0_18 = arith.constant 0 : index
    %20 = vector.load %arg8[%c0_17, %c0_18] : memref<8x4xf32, #tpu.memory_space<vmem>>, vector<8x4xf32>
    tpu.vector_store %arg8[%c0_17, %c0_18], %19 {strides = array<i32>} : memref<8x4xf32, #tpu.memory_space<vmem>>, vector<8x4xf32>,
    return
  }
  func.func @transform_0(%arg0: i32) -> (i32, i32) {
    %c0_i32 = arith.constant 0 : i32
    %c0_i32_0 = arith.constant 0 : i32
    return %arg0, %c0_i32 : i32, i32
  }
  func.func @transform_1(%arg0: i32) -> (i32, i32) {
    %c0_i32 = arith.constant 0 : i32
    %c0_i32_0 = arith.constant 0 : i32
    %c0_i32_1 = arith.constant 0 : i32
    return %c0_i32, %c0_i32_0 : i32, i32
  }
  func.func @transform_2(%arg0: i32) -> (i32, i32) {
    %c0_i32 = arith.constant 0 : i32
    %c0_i32_0 = arith.constant 0 : i32
    %c0_i32_1 = arith.constant 0 : i32
    return %c0_i32, %c0_i32_0 : i32, i32
  }
  func.func @transform_3(%arg0: i32) -> (i32, i32) {
    %c0_i32 = arith.constant 0 : i32
    %c0_i32_0 = arith.constant 0 : i32
    %c0_i32_1 = arith.constant 0 : i32
    return %c0_i32, %c0_i32_0 : i32, i32
  }
  func.func @transform_4(%arg0: i32) -> (i32, i32) {
    %c0_i32 = arith.constant 0 : i32
    %c0_i32_0 = arith.constant 0 : i32
    %c0_i32_1 = arith.constant 0 : i32
    return %c0_i32, %c0_i32_0 : i32, i32
  }
  func.func @transform_5(%arg0: i32) -> (i32, i32) {
    %c0_i32 = arith.constant 0 : i32
    %c0_i32_0 = arith.constant 0 : i32
    %c0_i32_1 = arith.constant 0 : i32
    return %c0_i32, %c0_i32_0 : i32, i32
  }
  func.func @transform_6(%arg0: i32) -> (i32, i32) {
    %c0_i32 = arith.constant 0 : i32
    %c0_i32_0 = arith.constant 0 : i32
    %c0_i32_1 = arith.constant 0 : i32
    return %c0_i32, %c0_i32_0 : i32, i32
  }
  func.func @transform_7(%arg0: i32) -> (i32, i32) {
    %c0_i32 = arith.constant 0 : i32
    %c0_i32_0 = arith.constant 0 : i32
    return %arg0, %c0_i32 : i32, i32
  }
}

</mosaic_0001>

<llo_original>
// kernel: tpu_custom_call.1
$region0: #{tpu_custom_call.1}
  #allocation0 [shape = 'u32[]', space=smem, size = 0x4, offset = 0x4, fixed_abs, tag = 'smem constant byte address 0x4 - core index']
  #allocation1 [shape = 'u32[72,128]{1,0:T(1,128)}', space=vmem, size = 0x9000, scoped, tag = 'internal scratch']
  %s0 = inlined_call_operand.hbm [shape: f32[8,8], index: 0, kind: input, shape index: {}]
  %s1 = inlined_call_operand.hbm [shape: f32[8,128], index: 1, kind: input, shape index: {}]
  %s2 = inlined_call_operand.vmem [shape: f32[1,128], index: 2, kind: input, shape index: {}]
  %s3 = inlined_call_operand.vmem [shape: f32[128,128], index: 3, kind: input, shape index: {}]
  %s4 = inlined_call_operand.vmem [shape: f32[1,128], index: 4, kind: input, shape index: {}]
  %s5 = inlined_call_operand.vmem [shape: f32[128,4], index: 5, kind: input, shape index: {}]
  %s6 = inlined_call_operand.vmem [shape: f32[1,4], index: 6, kind: input, shape index: {}]
  %s7 = inlined_call_operand.vmem [shape: f32[8,4], index: 7, kind: output, shape index: {}]
  %s8 = sld [smem:[#allocation0]]
  $region46: #{tpu_custom_call.1} parent=0
    _
  %s10 = ssub.s32 1, %s8
  %s11 = scalar_select 0, %s10, %s8
  $region1: #{tpu_custom_call.1} parent=0
    #allocation2 [shape = 'u8[4096]{0}', space=vmem, size = 0x1000, scoped, tag = 'input window, operand 0, single buffered']
    #allocation3 [shape = 's32[1]{0}', space=sflag, size = 0x4, scoped, tag = 'scoped memory for tpu_custom_call.1']
    #allocation4 [shape = 'u8[4096]{0}', space=vmem, size = 0x1000, scoped, tag = 'input window, operand 1, single buffered']
    #allocation5 [shape = 's32[1]{0}', space=sflag, size = 0x4, scoped, tag = 'scoped memory for tpu_custom_call.1']
    %12 = vsyncpa [#allocation3], 0
    %13 = vsyncpa [#allocation5], 0
    // Predicated region
    $region2: #{tpu_custom_call.1} parent=1 // pred_check
      _
    $region3: #{tpu_custom_call.1} parent=1 // pred_check_branch
      %15 = sbr.rel (0) target = $region5
    $region4: #{tpu_custom_call.1} parent=1 // pred_region
      %17 = vsyncadd [#allocation3], 0
      %s19 = sshll.u32 %s0, 4
      %s20 = int_to_ptr.hbm [resolvable:$true] %s19
      %s21 = sshll.u32 [#allocation2], 4
      %s22 = int_to_ptr.vmem [resolvable:$true] %s21
      %24 = dma.hbm_to_vmem [thread:$0]  %s20, 128, %s22, [#allocation3]
    $region5: #{tpu_custom_call.1} parent=1 // pred_fallthru
      _
    // Predicated region
    $region6: #{tpu_custom_call.1} parent=1 // pred_check
      _
    $region7: #{tpu_custom_call.1} parent=1 // pred_check_branch
      %26 = sbr.rel (0) target = $region9
    $region8: #{tpu_custom_call.1} parent=1 // pred_region
      %28 = vsyncadd [#allocation5], 0
      %s30 = sshll.u32 %s1, 4
      %s31 = int_to_ptr.hbm [resolvable:$true] %s30
      %s32 = sshll.u32 [#allocation4], 4
      %s33 = int_to_ptr.vmem [resolvable:$true] %s32
      %35 = dma.hbm_to_vmem [thread:$0]  %s31, 128, %s33, [#allocation5]
    $region9: #{tpu_custom_call.1} parent=1 // pred_fallthru
      _
    // Predicated region
    $region10: #{tpu_custom_call.1} parent=1 // pred_check
      _
    $region11: #{tpu_custom_call.1} parent=1 // pred_check_branch
      %37 = sbr.rel (0) target = $region13
    $region12: #{tpu_custom_call.1} parent=1 // pred_region
      _
    $region13: #{tpu_custom_call.1} parent=1 // pred_fallthru
      _
    // Predicated region
    $region14: #{tpu_custom_call.1} parent=1 // pred_check
      _
    $region15: #{tpu_custom_call.1} parent=1 // pred_check_branch
      %39 = sbr.rel (0) target = $region17
    $region16: #{tpu_custom_call.1} parent=1 // pred_region
      _
    $region17: #{tpu_custom_call.1} parent=1 // pred_fallthru
      _
    // Predicated region
    $region18: #{tpu_custom_call.1} parent=1 // pred_check
      _
    $region19: #{tpu_custom_call.1} parent=1 // pred_check_branch
      %41 = sbr.rel (0) target = $region21
    $region20: #{tpu_custom_call.1} parent=1 // pred_region
      _
    $region21: #{tpu_custom_call.1} parent=1 // pred_fallthru
      _
    // Predicated region
    $region22: #{tpu_custom_call.1} parent=1 // pred_check
      _
    $region23: #{tpu_custom_call.1} parent=1 // pred_check_branch
      %43 = sbr.rel (0) target = $region25
    $region24: #{tpu_custom_call.1} parent=1 // pred_region
      _
    $region25: #{tpu_custom_call.1} parent=1 // pred_fallthru
      _
    // Predicated region
    $region26: #{tpu_custom_call.1} parent=1 // pred_check
      _
    $region27: #{tpu_custom_call.1} parent=1 // pred_check_branch
      %45 = sbr.rel (0) target = $region29
    $region28: #{tpu_custom_call.1} parent=1 // pred_region
      _
    $region29: #{tpu_custom_call.1} parent=1 // pred_fallthru
      _
    // Predicated region
    $region30: #{tpu_custom_call.1} parent=1 // pred_check
      _
    $region31: #{tpu_custom_call.1} parent=1 // pred_check_branch
      %47 = sbr.rel (0) target = $region33
    $region32: #{tpu_custom_call.1} parent=1 // pred_region
      %49 = dma.done [#allocation3], 128
    $region33: #{tpu_custom_call.1} parent=1 // pred_fallthru
      _
    // Predicated region
    $region34: #{tpu_custom_call.1} parent=1 // pred_check
      _
    $region35: #{tpu_custom_call.1} parent=1 // pred_check_branch
      %51 = sbr.rel (0) target = $region37
    $region36: #{tpu_custom_call.1} parent=1 // pred_region
      %53 = dma.done [#allocation5], 128
    $region37: #{tpu_custom_call.1} parent=1 // pred_fallthru
      _
    %v54 = vld [vmem:[#allocation2] sm:$0xff]
    %v55 = vld [vmem:[#allocation4] sm:$0xff]
    %v56 = vld [vmem:[%s2] sm:$0x1]
    %v58 = vperm.slane %v56, 0
    %vm60 = vcmask 64512
    %v62 = vsel %vm60, %v54, 0
    %64 = vmatpush.msra.mxu0 0.0
    %65 = vmatpush.msra.mxu0 0.0
    %66 = vmatpush.msra.mxu0 0.0
    %67 = vmatpush.msra.mxu0 0.0
    %68 = vmatpush.msra.mxu0 0.0
    %69 = vmatpush.msra.mxu0 0.0
    %70 = vmatpush.msra.mxu0 0.0
    %71 = vmatpush.msra.mxu0 0.0
    %72 = vmatpush.msra.mxu0 0.0
    %73 = vmatpush.msra.mxu0 0.0
    %74 = vmatpush.msra.mxu0 0.0
    %75 = vmatpush.msra.mxu0 0.0
    %76 = vmatpush.msra.mxu0 0.0
    %77 = vmatpush.msra.mxu0 0.0
    %78 = vmatpush.msra.mxu0 0.0
    %79 = vmatpush.msra.mxu0 %v55
    %80 = vmatmul.f32.gmra.mxu0 %v62
    %v81 = vpop.f32.mrf.mxu0
    %v82 = vadd.f32 %v58, %v81
    %83 = vdwg.mxu0
    %v84 = vmax.f32 %v82, 0.0
    %v85 = vld [vmem:[%s3] sm:$0xff]
    %v86 = vld [vmem:[%s3 + $0x8] sm:$0xff]
    %v87 = vld [vmem:[%s3 + $0x10] sm:$0xff]
    %v88 = vld [vmem:[%s3 + $0x18] sm:$0xff]
    %v89 = vld [vmem:[%s3 + $0x20] sm:$0xff]
    %v90 = vld [vmem:[%s3 + $0x28] sm:$0xff]
    %v91 = vld [vmem:[%s3 + $0x30] sm:$0xff]
    %v92 = vld [vmem:[%s3 + $0x38] sm:$0xff]
    %v93 = vld [vmem:[%s3 + $0x40] sm:$0xff]
    %v94 = vld [vmem:[%s3 + $0x48] sm:$0xff]
    %v95 = vld [vmem:[%s3 + $0x50] sm:$0xff]
    %v96 = vld [vmem:[%s3 + $0x58] sm:$0xff]
    %v97 = vld [vmem:[%s3 + $0x60] sm:$0xff]
    %v98 = vld [vmem:[%s3 + $0x68] sm:$0xff]
    %v99 = vld [vmem:[%s3 + $0x70] sm:$0xff]
    %v100 = vld [vmem:[%s3 + $0x78] sm:$0xff]
    %v101 = vld [vmem:[%s4] sm:$0x1]
    %v103 = vperm.slane %v101, 0
    %105 = vmatpush.msra.mxu0 %v100
    %106 = vmatpush.msra.mxu0 %v99
    %107 = vmatpush.msra.mxu0 %v98
    %108 = vmatpush.msra.mxu0 %v97
    %109 = vmatpush.msra.mxu0 %v96
    %110 = vmatpush.msra.mxu0 %v95
    %111 = vmatpush.msra.mxu0 %v94
    %112 = vmatpush.msra.mxu0 %v93
    %113 = vmatpush.msra.mxu0 %v92
    %114 = vmatpush.msra.mxu0 %v91
    %115 = vmatpush.msra.mxu0 %v90
    %116 = vmatpush.msra.mxu0 %v89
    %117 = vmatpush.msra.mxu0 %v88
    %118 = vmatpush.msra.mxu0 %v87
    %119 = vmatpush.msra.mxu0 %v86
    %120 = vmatpush.msra.mxu0 %v85
    %121 = vmatmul.f32.gmra.mxu0 %v84
    %v122 = vpop.f32.mrf.mxu0
    %v123 = vadd.f32 %v103, %v122
    %124 = vdwg.mxu0
    %v125 = vmax.f32 %v123, 0.0
    %v126 = vld [vmem:[%s5] sm:$0xff]
    %v127 = vld [vmem:[%s5 + $0x8] sm:$0xff]
    %v128 = vld [vmem:[%s5 + $0x10] sm:$0xff]
    %v129 = vld [vmem:[%s5 + $0x18] sm:$0xff]
    %v130 = vld [vmem:[%s5 + $0x20] sm:$0xff]
    %v131 = vld [vmem:[%s5 + $0x28] sm:$0xff]
    %v132 = vld [vmem:[%s5 + $0x30] sm:$0xff]
    %v133 = vld [vmem:[%s5 + $0x38] sm:$0xff]
    %v134 = vld [vmem:[%s5 + $0x40] sm:$0xff]
    %v135 = vld [vmem:[%s5 + $0x48] sm:$0xff]
    %v136 = vld [vmem:[%s5 + $0x50] sm:$0xff]
    %v137 = vld [vmem:[%s5 + $0x58] sm:$0xff]
    %v138 = vld [vmem:[%s5 + $0x60] sm:$0xff]
    %v139 = vld [vmem:[%s5 + $0x68] sm:$0xff]
    %v140 = vld [vmem:[%s5 + $0x70] sm:$0xff]
    %v141 = vld [vmem:[%s5 + $0x78] sm:$0xff]
    %v142 = vld [vmem:[%s6] sm:$0x1]
    %v144 = vperm.slane %v142, 0
    %146 = vmatpush.msra.mxu0 %v141
    %147 = vmatpush.msra.mxu0 %v140
    %148 = vmatpush.msra.mxu0 %v139
    %149 = vmatpush.msra.mxu0 %v138
    %150 = vmatpush.msra.mxu0 %v137
    %151 = vmatpush.msra.mxu0 %v136
    %152 = vmatpush.msra.mxu0 %v135
    %153 = vmatpush.msra.mxu0 %v134
    %154 = vmatpush.msra.mxu0 %v133
    %155 = vmatpush.msra.mxu0 %v132
    %156 = vmatpush.msra.mxu0 %v131
    %157 = vmatpush.msra.mxu0 %v130
    %158 = vmatpush.msra.mxu0 %v129
    %159 = vmatpush.msra.mxu0 %v128
    %160 = vmatpush.msra.mxu0 %v127
    %161 = vmatpush.msra.mxu0 %v126
    %162 = vmatmul.f32.gmra.mxu0 %v125
    %v163 = vpop.f32.mrf.mxu0
    %v164 = vadd.f32 %v144, %v163
    %165 = vdwg.mxu0
    %vm166 = vcmask 31744
    %167 = vst.msk [vmem:[%s7] sm:$0xff] %vm166, %v164
    // Predicated region
    $region38: #{tpu_custom_call.1} parent=1 // pred_check
      _
    $region39: #{tpu_custom_call.1} parent=1 // pred_check_branch
      %169 = sbr.rel (0) target = $region41
    $region40: #{tpu_custom_call.1} parent=1 // pred_region
      _
    $region41: #{tpu_custom_call.1} parent=1 // pred_fallthru
      _
    // Predicated region
    $region42: #{tpu_custom_call.1} parent=1 // pred_check
      _
    $region43: #{tpu_custom_call.1} parent=1 // pred_check_branch
      %171 = sbr.rel (0) target = $region45
    $region44: #{tpu_custom_call.1} parent=1 // pred_region
      _
    $region45: #{tpu_custom_call.1} parent=1 // pred_fallthru
      _
    %172 = vsyncpa [#allocation3], 1
    %173 = vsyncpa [#allocation5], 1

</llo_original>
